<compile_context>
chip_gen: v7x
topology: tpu7x:2x2x1
jax: 0.10.0
libtpu: 0.0.40
codegen_flags: <defaults>
</compile_context>

<pallas_src>
import math

import jax
import jax.numpy as jnp
from jax.experimental import pallas as pl
from jax.experimental.pallas import tpu as pltpu


# Per-block VMEM footprint target.  Streaming kernels reach ~85% of HBM
# roofline well before 1 MiB tiles; small tiles keep grid_m large (megacore /
# pipelining) and scoped-VMEM use low (important on v7x's 64 MiB).
_BLOCK_TARGET_BYTES = 1 << 20  # 1 MiB


def _action_norm_kernel(x_ref, ms_ref, o_ref):
    # ms_ref: (2, L) float32 -> row 0 = tiled mean, row 1 = tiled 1/std.
    mean = ms_ref[0:1, :]
    inv_std = ms_ref[1:2, :]
    x = x_ref[...].astype(jnp.float32)
    o_ref[...] = ((x - mean) * inv_std).astype(o_ref.dtype)


def action_norm(x, mean, std):
    """(x - mean) / std with mean/std of shape (D,), broadcast over leading dims."""
    assert mean.shape == std.shape and mean.ndim == 1, "Shape Must Match"
    D = mean.shape[0]
    assert x.shape[-1] == D

    orig_shape = x.shape
    dtype = x.dtype
    itemsize = jnp.dtype(dtype).itemsize

    # Stats math in f32; exact division done ONCE here, not per grid step.
    mean_f32 = mean.astype(jnp.float32)
    inv_std_f32 = 1.0 / std.astype(jnp.float32)

    # Sublane granularity for this dtype (f32 -> 8, bf16 -> 16, int8 -> 32).
    sub = 8 * max(1, 4 // itemsize)

    # ---- lane-dense fold: [N, D] -> [M, L], L a multiple of 128 --------------
    L = D * 128 // math.gcd(D, 128)  # lcm(D, 128)
    if sub * L * itemsize > _BLOCK_TARGET_BYTES:
        # Guard for large / 128-coprime D: lane folding would exceed the block
        # budget; block on the natural last dim instead (full-dim blocks are
        # always a legal BlockSpec, stores just get a masked tail).
        L = D
    k = L // D

    x2 = x.reshape(-1, D)
    N = x2.shape[0]

    # Pad only to a multiple of the fold factor (skipped in the common case).
    pad_rows = (-N) % k
    if pad_rows:
        x2 = jnp.pad(x2, ((0, pad_rows), (0, 0)))
    M = (N + pad_rows) // k
    xl = x2.reshape(M, L)

    # ---- row-tile selection ---------------------------------------------------
    tile_m = max(sub, (_BLOCK_TARGET_BYTES // (L * itemsize)) // sub * sub)
    # Keep >= 4 blocks whenever there is enough work so v7x can shard the
    # "parallel" axis across both TensorCores and still pipeline per core.
    min_blocks = 4
    if M >= min_blocks * sub:
        tile_m = min(tile_m, max(sub, (M // min_blocks) // sub * sub))
    # Never exceed the array: a single full-extent block is always legal.
    if tile_m >= M:
        tile_m = M
    grid_m = pl.cdiv(M, tile_m)

    # Fused, resident broadcast operand: (2, L) = [tiled mean; tiled 1/std].
    ms = jnp.stack([jnp.tile(mean_f32, k), jnp.tile(inv_std_f32, k)], axis=0)

    cost = pl.CostEstimate(
        flops=2 * M * L,
        transcendentals=0,
        bytes_accessed=2 * M * L * itemsize + 2 * L * 4,
    )

    # Scoped-VMEM need: double-buffered in + out tiles, ms tile, small margin.
    vmem_needed = 4 * tile_m * L * itemsize + 4 * L * 4 + (1 << 20)
    compiler_kwargs = dict(dimension_semantics=("parallel",))
    if vmem_needed > (16 << 20):
        # Only raise the scoped limit in the (rare) huge-D fallback case.
        compiler_kwargs["vmem_limit_bytes"] = min(vmem_needed, 64 << 20)

    out = pl.pallas_call(
        _action_norm_kernel,
        out_shape=jax.ShapeDtypeStruct((M, L), dtype),
        grid=(grid_m,),
        in_specs=[
            pl.BlockSpec((tile_m, L), lambda i: (i, 0)),
            pl.BlockSpec((2, L), lambda i: (0, 0)),
        ],
        out_specs=pl.BlockSpec((tile_m, L), lambda i: (i, 0)),
        compiler_params=pltpu.CompilerParams(**compiler_kwargs),
        cost_estimate=cost,
    )(xl, ms)

    out = out.reshape(M * k, D)
    if pad_rows:
        out = out[:N]
    return out.reshape(orig_shape)


# TODO(synk): `unnormalize` (y * std + mean) is not part of forward(); not implemented.


if __name__ == "__main__":
    key = jax.random.PRNGKey(0)
    k_x, k_m, k_s, k_x2 = jax.random.split(key, 4)

    B, T, D = 2, 8, 32  # batch, seq, action dim
    x = jax.random.normal(k_x, (B, T, D), dtype=jnp.float32)
    mean = jax.random.normal(k_m, (D,), dtype=jnp.float32)
    # std strictly positive, deterministic
    std = jax.random.uniform(k_s, (D,), dtype=jnp.float32, minval=0.5, maxval=1.5)

    y = action_norm(x, mean, std)
    y = jax.block_until_ready(y)

    ref = (x - mean) / std
    assert y.shape == ref.shape
    assert jnp.allclose(y, ref, rtol=1e-5, atol=1e-5), "mismatch vs reference"

    # Exercise the ragged path: N not a multiple of the fold factor k.
    x_odd = jax.random.normal(k_x2, (3, 5, D), dtype=jnp.float32)
    y_odd = jax.block_until_ready(action_norm(x_odd, mean, std))
    ref_odd = (x_odd - mean) / std
    assert y_odd.shape == ref_odd.shape
    assert jnp.allclose(y_odd, ref_odd, rtol=1e-5, atol=1e-5), "mismatch (ragged)"

    print("KERNEL_OK")
</pallas_src>

<mosaic_0001>
module attributes {stable_mosaic.version = 11 : i64} {
  func.func @_action_norm_kernel(%arg0: i32, %arg1: memref<4x128xf32, #tpu.memory_space<vmem>>, %arg2: memref<2x128xf32, #tpu.memory_space<vmem>>, %arg3: memref<4x128xf32, #tpu.memory_space<vmem>>) attributes {dimension_semantics = [#tpu.dimension_semantics<parallel>], iteration_bounds = array<i64: 1>, scalar_prefetch = 0 : i64, scratch_operands = 0 : i64, tpu.core_type = #tpu.core_type<tc>, window_params = [{transform_indices = @transform_0, window_bounds = array<i64: 4, 128>}, {pipeline_mode = #tpu.pipeline_mode<synchronous>, transform_indices = @transform_1, window_bounds = array<i64: 2, 128>}, {transform_indices = @transform_2, window_bounds = array<i64: 4, 128>}]} {
    %c0 = arith.constant 0 : index
    %c0_0 = arith.constant 0 : index
    %0 = vector.load %arg2[%c0, %c0_0] : memref<2x128xf32, #tpu.memory_space<vmem>>, vector<1x128xf32>
    %c1 = arith.constant 1 : index
    %c0_1 = arith.constant 0 : index
    %1 = vector.load %arg2[%c1, %c0_1] : memref<2x128xf32, #tpu.memory_space<vmem>>, vector<1x128xf32>
    %c0_2 = arith.constant 0 : index
    %c0_3 = arith.constant 0 : index
    %2 = vector.load %arg1[%c0_2, %c0_3] : memref<4x128xf32, #tpu.memory_space<vmem>>, vector<4x128xf32>
    %3 = vector.broadcast %0 : vector<1x128xf32> to vector<4x128xf32>
    %4 = arith.subf %2, %3 : vector<4x128xf32>
    %5 = vector.broadcast %1 : vector<1x128xf32> to vector<4x128xf32>
    %6 = arith.mulf %4, %5 : vector<4x128xf32>
    %c0_4 = arith.constant 0 : index
    %c0_5 = arith.constant 0 : index
    %7 = vector.load %arg3[%c0_4, %c0_5] : memref<4x128xf32, #tpu.memory_space<vmem>>, vector<4x128xf32>
    tpu.vector_store %arg3[%c0_4, %c0_5], %6 {strides = array<i32>} : memref<4x128xf32, #tpu.memory_space<vmem>>, vector<4x128xf32>,
    return
  }
  func.func @transform_0(%arg0: i32) -> (i32, i32) {
    %c0_i32 = arith.constant 0 : i32
    %c0_i32_0 = arith.constant 0 : i32
    return %arg0, %c0_i32 : i32, i32
  }
  func.func @transform_1(%arg0: i32) -> (i32, i32) {
    %c0_i32 = arith.constant 0 : i32
    %c0_i32_0 = arith.constant 0 : i32
    %c0_i32_1 = arith.constant 0 : i32
    return %c0_i32, %c0_i32_0 : i32, i32
  }
  func.func @transform_2(%arg0: i32) -> (i32, i32) {
    %c0_i32 = arith.constant 0 : i32
    %c0_i32_0 = arith.constant 0 : i32
    return %arg0, %c0_i32 : i32, i32
  }
}

</mosaic_0001>

<llo_original>
// kernel: tpu_custom_call.1
$region0: #{tpu_custom_call.1}
  #allocation0 [shape = 'u32[]', space=smem, size = 0x4, offset = 0x4, fixed_abs, tag = 'smem constant byte address 0x4 - core index']
  #allocation1 [shape = 'u32[144,128]{1,0:T(1,128)}', space=vmem, size = 0x12000, scoped, tag = 'internal scratch']
  %s0 = inlined_call_operand.hbm [shape: f32[4,128], index: 0, kind: input, shape index: {}]
  %s1 = inlined_call_operand.vmem [shape: f32[2,128], index: 1, kind: input, shape index: {}]
  %s2 = inlined_call_operand.hbm [shape: f32[4,128], index: 2, kind: output, shape index: {}]
  %s3 = sld [smem:[#allocation0]]
  $region22: #{tpu_custom_call.1} parent=0
    _
  %s5 = ssub.s32 1, %s3
  %s6 = scalar_select 0, %s5, %s3
  $region1: #{tpu_custom_call.1} parent=0
    #allocation2 [shape = 'u8[2048]{0}', space=vmem, size = 0x800, scoped, tag = 'input window, operand 0, single buffered']
    #allocation3 [shape = 's32[1]{0}', space=sflag, size = 0x4, scoped, tag = 'scoped memory for tpu_custom_call.1']
    #allocation4 [shape = 's32[1]{0}', space=sflag, size = 0x4, scoped, tag = 'scoped memory for tpu_custom_call.1']
    #allocation5 [shape = 'u8[2048]{0}', space=vmem, size = 0x800, scoped, tag = 'output window, operand 0, single buffered']
    %7 = vsyncpa [#allocation3], 0
    %8 = vsyncpa [#allocation4], 0
    // Predicated region
    $region2: #{tpu_custom_call.1} parent=1 // pred_check
      _
    $region3: #{tpu_custom_call.1} parent=1 // pred_check_branch
      %10 = sbr.rel (0) target = $region5
    $region4: #{tpu_custom_call.1} parent=1 // pred_region
      %s12 = ssub.s32 64, 64
      %13 = vsyncadd [#allocation3], %s12
      %s15 = sshll.u32 [#allocation2], 4
      %s16 = int_to_ptr.vmem [resolvable:$true] %s15
      %18 = dma.hbm_to_vmem [thread:$0]  %s0, 64, %s16, [#allocation3]
    $region5: #{tpu_custom_call.1} parent=1 // pred_fallthru
      _
    // Predicated region
    $region6: #{tpu_custom_call.1} parent=1 // pred_check
      _
    $region7: #{tpu_custom_call.1} parent=1 // pred_check_branch
      %20 = sbr.rel (0) target = $region9
    $region8: #{tpu_custom_call.1} parent=1 // pred_region
      _
    $region9: #{tpu_custom_call.1} parent=1 // pred_fallthru
      _
    // Predicated region
    $region10: #{tpu_custom_call.1} parent=1 // pred_check
      _
    $region11: #{tpu_custom_call.1} parent=1 // pred_check_branch
      %22 = sbr.rel (0) target = $region13
    $region12: #{tpu_custom_call.1} parent=1 // pred_region
      %23 = dma.done [#allocation3], 64
    $region13: #{tpu_custom_call.1} parent=1 // pred_fallthru
      _
    %v24 = vld [vmem:[%s1] sm:$0x1]
    %v25 = vld [vmem:[%s1 + $0x1] sm:$0x1]
    %v26 = vld [vmem:[#allocation2] sm:$0xf]
    %v27 = vlaneseq
    %v28 = vshrl.u32 %v27, 7
    %v29 = vsub.s32 0, %v28
    %v30 = vrot.slane %v24, %v29
    %v31 = vsub.f32 %v26, %v30
    %v32 = vlaneseq
    %v33 = vshrl.u32 %v32, 7
    %v34 = vsub.s32 0, %v33
    %v35 = vrot.slane %v25, %v34
    %v36 = vmul.f32 %v31, %v35
    %37 = vst [vmem:[#allocation5] sm:$0xf] %v36
    // Predicated region
    $region14: #{tpu_custom_call.1} parent=1 // pred_check
      _
    $region15: #{tpu_custom_call.1} parent=1 // pred_check_branch
      %39 = sbr.rel (0) target = $region17
    $region16: #{tpu_custom_call.1} parent=1 // pred_region
      %s41 = ssub.s32 64, 64
      %42 = vsyncadd [#allocation4], %s41
      %s44 = sshll.u32 [#allocation5], 4
      %s45 = int_to_ptr.vmem [resolvable:$true] %s44
      %47 = dma.vmem_to_hbm [thread:$0]  %s45, 64, %s2, [#allocation4]
    $region17: #{tpu_custom_call.1} parent=1 // pred_fallthru
      _
    // Predicated region
    $region18: #{tpu_custom_call.1} parent=1 // pred_check
      _
    $region19: #{tpu_custom_call.1} parent=1 // pred_check_branch
      %49 = sbr.rel (0) target = $region21
    $region20: #{tpu_custom_call.1} parent=1 // pred_region
      %50 = dma.done [#allocation4], 64
    $region21: #{tpu_custom_call.1} parent=1 // pred_fallthru
      _
    %51 = vsyncpa [#allocation3], 1
    %52 = vsyncpa [#allocation4], 1

</llo_original>
